<compile_context>
chip_gen: v7x
topology: tpu7x:2x2x1
jax: 0.10.0
libtpu: 0.0.40
codegen_flags: <defaults>
</compile_context>

<pallas_src>
import functools

import jax
import jax.numpy as jnp
from jax import lax
from jax.experimental import pallas as pl
from jax.experimental.pallas import tpu as pltpu

_MIB = 1024 * 1024


def _round_up(x, m):
    return -(-x // m) * m


def _sublane(itemsize):
    if itemsize >= 4:
        return 8
    if itemsize == 2:
        return 16
    return 32          # int8 / fp8: minimum sublane tile is 32


def _hw_params():
    """(block_budget_bytes, vmem_limit_bytes, multi_tc) for the local TPU generation."""
    vmem_cap = None
    multi_tc = None
    try:
        info = pltpu.get_tpu_info()
        cap = getattr(info, "vmem_capacity_bytes", None)
        if isinstance(cap, int) and cap > 0:
            vmem_cap = cap
        for attr in ("num_cores", "num_tensorcores", "tensorcores_per_chip", "core_count"):
            v = getattr(info, attr, None)
            if isinstance(v, int) and v > 0:
                multi_tc = v > 1
                break
    except Exception:
        pass
    kind = ""
    try:
        kind = jax.devices()[0].device_kind.lower()
    except Exception:
        pass
    if vmem_cap is None:
        if any(g in kind for g in ("v4", "v5", "v6")):
            vmem_cap = 128 * _MIB
        else:                                   # v7x-class or unknown: be conservative
            vmem_cap = 64 * _MIB
    if multi_tc is None:
        multi_tc = ("v7" in kind) or ("v4" in kind) or ("v5p" in kind)
    if vmem_cap >= 100 * _MIB:                  # v5e / v6e: 128 MiB physical VMEM
        return 24 * _MIB, 80 * _MIB, multi_tc
    return 12 * _MIB, 48 * _MIB, multi_tc       # v7x-class: 64 MiB physical VMEM


def _choose_tiles(bc, hw, itemsize, block_budget, multi_tc):
    """Pick (tile_rows, tile_hw); tile_hw == hw selects the whole-row path."""
    sub = _sublane(itemsize)
    row_bytes = hw * itemsize
    min_rows = bc if bc < sub else sub

    if min_rows * row_bytes <= block_budget:
        # Whole-row path: rows sized from the real bc against the budget.
        tr = max(sub, (block_budget // row_bytes) // sub * sub)
        if multi_tc and bc > 2 * sub:
            # Keep >= 2 row tiles so the "parallel" axis can shard across TensorCores.
            tr = min(tr, _round_up(pl.cdiv(bc, 2), sub))
        if tr >= bc:
            tr = bc                             # single (possibly unaligned) full block
        return tr, hw

    # Chunked path (huge H*W): small row tile (keeps in-register lane partials
    # spill-free), the remaining block budget goes to one long lane-aligned hw chunk.
    tr = max(sub, min(64, _round_up(bc, sub)))
    if multi_tc and bc > 2 * sub:
        tr = min(tr, max(sub, _round_up(pl.cdiv(bc, 2), sub)))
    if tr >= bc:
        tr = bc
    th = max(128, (block_budget // (tr * itemsize)) // 128 * 128)
    return tr, th


def _finalize_std(s, q, n_valid):
    """Unbiased std from shifted sum `s` and sum-of-squares `q` over n_valid elements."""
    n = jnp.float32(n_valid)
    mean = s / n
    if n_valid > 1:
        var = (q - n * mean * mean) / jnp.float32(n_valid - 1)
        var = jnp.maximum(var, 0.0)             # guard tiny negative cancellation noise
    else:
        var = jnp.full_like(mean, jnp.nan)      # torch .std() of a single element is NaN
    return jnp.sqrt(var)


def _std_whole_row_kernel(x_ref, o_ref, *, hw):
    """One invocation sees complete rows: single pass, one XLU reduce per row tile."""
    x = x_ref[...].astype(jnp.float32)          # (tile_rows, hw)
    shift = x[:, :1]                            # per-row shift (first element)
    xs = x - shift
    s = jnp.sum(xs, axis=-1, keepdims=True)
    q = jnp.sum(xs * xs, axis=-1, keepdims=True)
    o_ref[...] = _finalize_std(s, q, hw).astype(o_ref.dtype)


def _std_chunked_kernel(x_ref, o_ref, sum_ref, sumsq_ref, shift_ref, *, hw, tile_hw):
    """Huge H*W: lane-dense (tr, 128) accumulators; XLU reduce only on the last k step."""
    k = pl.program_id(1)
    num_k = pl.cdiv(hw, tile_hw)                # static python int
    last_valid = hw - (num_k - 1) * tile_hw     # valid columns of the last k block

    @pl.when(k == 0)
    def _init():
        sum_ref[...] = jnp.zeros_like(sum_ref)
        sumsq_ref[...] = jnp.zeros_like(sumsq_ref)
        shift_ref[...] = jnp.broadcast_to(
            x_ref[:, :1].astype(jnp.float32), shift_ref.shape)

    def _accumulate(valid):
        # Only the statically-known valid columns of this block are read, so the
        # undefined tail of a partial block never reaches the accumulators.
        shift = shift_ref[...]                  # (tr, 128), lane-dense
        nfull, rem = divmod(valid, 128)
        if nfull > 0:
            def group(g, carry):
                ps, pq = carry
                off = pl.multiple_of(g * 128, 128)
                xg = x_ref[:, pl.ds(off, 128)].astype(jnp.float32) - shift
                return ps + xg, pq + xg * xg

            zeros = jnp.zeros(sum_ref.shape, jnp.float32)
            ps, pq = lax.fori_loop(0, nfull, group, (zeros, zeros),
                                   unroll=min(8, nfull))
            sum_ref[...] += ps
            sumsq_ref[...] += pq
        if rem > 0:
            c0 = nfull * 128
            xr = x_ref[:, c0:c0 + rem].astype(jnp.float32) - shift_ref[:, :1]
            sum_ref[:, :1] += jnp.sum(xr, axis=-1, keepdims=True)
            sumsq_ref[:, :1] += jnp.sum(xr * xr, axis=-1, keepdims=True)

    if last_valid == tile_hw:                   # hw divides evenly: no tail handling
        _accumulate(tile_hw)
    else:
        @pl.when(k < num_k - 1)
        def _full_steps():
            _accumulate(tile_hw)

        @pl.when(k == num_k - 1)
        def _tail_step():
            _accumulate(last_valid)

    @pl.when(k == num_k - 1)
    def _finalize():
        s = jnp.sum(sum_ref[...], axis=-1, keepdims=True)
        q = jnp.sum(sumsq_ref[...], axis=-1, keepdims=True)
        o_ref[...] = _finalize_std(s, q, hw).astype(o_ref.dtype)


def std_pool(x, *, tile_rows=None, tile_hw=None, block_bytes=None):
    """Pallas TPU implementation of StdPool.forward for NCHW input."""
    b, c, h, w = x.shape
    bc, hw = b * c, h * w
    itemsize = jnp.dtype(x.dtype).itemsize

    budget, vmem_limit, multi_tc = _hw_params()
    if block_bytes is not None:
        budget = block_bytes
    auto_tr, auto_th = _choose_tiles(bc, hw, itemsize, budget, multi_tc)
    tr = auto_tr if tile_rows is None else tile_rows
    th = auto_th if tile_hw is None else min(tile_hw, hw)

    x2d = x.reshape(bc, hw)                     # contiguous -> free reshape; no pad copy
    out_struct = jax.ShapeDtypeStruct((bc, 1), x.dtype)
    grid_rows = pl.cdiv(bc, tr)

    if th >= hw:
        # Whole-row path.
        out = pl.pallas_call(
            functools.partial(_std_whole_row_kernel, hw=hw),
            out_shape=out_struct,
            grid_spec=pltpu.PrefetchScalarGridSpec(
                num_scalar_prefetch=0,
                grid=(grid_rows,),
                in_specs=[pl.BlockSpec((tr, hw), lambda i: (i, 0))],
                out_specs=pl.BlockSpec((tr, 1), lambda i: (i, 0)),
            ),
            compiler_params=pltpu.CompilerParams(
                dimension_semantics=("parallel",),
                vmem_limit_bytes=vmem_limit,
            ),
        )(x2d)
    else:
        if th % 128:
            raise ValueError(f"tile_hw must be a multiple of 128, got {th}")
        grid_k = pl.cdiv(hw, th)
        out = pl.pallas_call(
            functools.partial(_std_chunked_kernel, hw=hw, tile_hw=th),
            out_shape=out_struct,
            grid_spec=pltpu.PrefetchScalarGridSpec(
                num_scalar_prefetch=0,
                grid=(grid_rows, grid_k),       # hw reduction axis last
                # If profiling on v7x shows exposed DMA on the hw axis, add
                # pipeline_mode=pl.Buffered(3) to this BlockSpec.
                in_specs=[pl.BlockSpec((tr, th), lambda i, k: (i, k))],
                out_specs=pl.BlockSpec((tr, 1), lambda i, k: (i, 0)),
                scratch_shapes=[pltpu.VMEM((tr, 128), jnp.float32),   # sum
                                pltpu.VMEM((tr, 128), jnp.float32),   # sum of squares
                                pltpu.VMEM((tr, 128), jnp.float32)],  # per-row shift
            ),
            compiler_params=pltpu.CompilerParams(
                dimension_semantics=("parallel", "arbitrary"),
                vmem_limit_bytes=vmem_limit,
            ),
        )(x2d)

    return out.reshape(b, c, 1, 1)


def _reference_std_pool(x):
    b, c, _, _ = x.shape
    flat = x.reshape(b, c, -1).astype(jnp.float32)
    std = jnp.std(flat, axis=2, ddof=1)
    return std.reshape(b, c, 1, 1).astype(x.dtype)


if __name__ == "__main__":
    key = jax.random.PRNGKey(0)
    k1, k2, k3 = jax.random.split(key, 3)

    # 1) Canonical small NCHW input -> whole-row path, aligned rows.
    x1 = jax.random.normal(k1, (2, 4, 16, 16), dtype=jnp.float32)
    o1 = jax.block_until_ready(std_pool(x1))
    r1 = _reference_std_pool(x1)
    assert o1.shape == (2, 4, 1, 1), o1.shape
    assert jnp.allclose(o1, r1, rtol=1e-4, atol=1e-5), (o1, r1)

    # 2) Non-aligned rows and lanes (bc=15, hw=63) -> whole-row path, partial blocks.
    x2 = jax.random.normal(k2, (3, 5, 7, 9), dtype=jnp.float32) * 2.0 + 0.5
    o2 = jax.block_until_ready(std_pool(x2))
    r2 = _reference_std_pool(x2)
    assert o2.shape == (3, 5, 1, 1), o2.shape
    assert jnp.allclose(o2, r2, rtol=1e-4, atol=1e-5), (o2, r2)

    # 3) Forced chunked path: multiple hw chunks, ragged hw tail (704 = 2*256 + 192),
    #    and a partial row block (bc=15 with tile_rows=8).
    x3 = jax.random.normal(k3, (3, 5, 22, 32), dtype=jnp.float32) * 3.0 - 1.0
    o3 = jax.block_until_ready(std_pool(x3, tile_rows=8, tile_hw=256))
    r3 = _reference_std_pool(x3)
    assert o3.shape == (3, 5, 1, 1), o3.shape
    assert jnp.allclose(o3, r3, rtol=1e-4, atol=1e-5), (o3, r3)

    print("KERNEL_OK")
</pallas_src>

<mosaic_0001>
module attributes {stable_mosaic.version = 11 : i64} {
  func.func @_std_whole_row_kernel(%arg0: i32, %arg1: memref<8x256xf32, #tpu.memory_space<vmem>>, %arg2: memref<8x1xf32, #tpu.memory_space<vmem>>) attributes {dimension_semantics = [#tpu.dimension_semantics<parallel>], iteration_bounds = array<i64: 1>, scalar_prefetch = 0 : i64, scratch_operands = 0 : i64, tpu.core_type = #tpu.core_type<tc>, window_params = [{transform_indices = @transform_0, window_bounds = array<i64: 8, 256>}, {transform_indices = @transform_1, window_bounds = array<i64: 8, 1>}]} {
    %c0 = arith.constant 0 : index
    %c0_0 = arith.constant 0 : index
    %0 = vector.load %arg1[%c0, %c0_0] : memref<8x256xf32, #tpu.memory_space<vmem>>, vector<8x256xf32>
    %1 = vector.extract_strided_slice %0 {offsets = [0, 0], sizes = [8, 1], strides = [1, 1]} : vector<8x256xf32> to vector<8x1xf32>
    %2 = vector.broadcast %1 : vector<8x1xf32> to vector<8x256xf32>
    %3 = arith.subf %0, %2 : vector<8x256xf32>
    %cst = arith.constant dense<0.000000e+00> : vector<8xf32>
    %4 = vector.multi_reduction <add>, %3, %cst [1] : vector<8x256xf32> to vector<8xf32>
    %5 = vector.shape_cast %4 : vector<8xf32> to vector<8x1xf32>
    %6 = arith.mulf %3, %3 : vector<8x256xf32>
    %cst_1 = arith.constant dense<0.000000e+00> : vector<8xf32>
    %7 = vector.multi_reduction <add>, %6, %cst_1 [1] : vector<8x256xf32> to vector<8xf32>
    %8 = vector.shape_cast %7 : vector<8xf32> to vector<8x1xf32>
    %cst_2 = arith.constant 2.560000e+02 : f32
    %9 = vector.broadcast %cst_2 : f32 to vector<8x1xf32>
    %10 = arith.divf %5, %9 : vector<8x1xf32>
    %cst_3 = arith.constant 2.560000e+02 : f32
    %11 = vector.broadcast %cst_3 : f32 to vector<8x1xf32>
    %12 = arith.mulf %11, %10 : vector<8x1xf32>
    %13 = arith.mulf %12, %10 : vector<8x1xf32>
    %14 = arith.subf %8, %13 : vector<8x1xf32>
    %cst_4 = arith.constant 2.550000e+02 : f32
    %15 = vector.broadcast %cst_4 : f32 to vector<8x1xf32>
    %16 = arith.divf %14, %15 : vector<8x1xf32>
    %cst_5 = arith.constant 0.000000e+00 : f32
    %17 = vector.broadcast %cst_5 : f32 to vector<8x1xf32>
    %18 = arith.maximumf %16, %17 : vector<8x1xf32>
    %19 = math.sqrt %18 : vector<8x1xf32>
    %c0_6 = arith.constant 0 : index
    %c0_7 = arith.constant 0 : index
    %20 = vector.load %arg2[%c0_6, %c0_7] : memref<8x1xf32, #tpu.memory_space<vmem>>, vector<8x1xf32>
    tpu.vector_store %arg2[%c0_6, %c0_7], %19 {strides = array<i32>} : memref<8x1xf32, #tpu.memory_space<vmem>>, vector<8x1xf32>,
    return
  }
  func.func @transform_0(%arg0: i32) -> (i32, i32) {
    %c0_i32 = arith.constant 0 : i32
    %c0_i32_0 = arith.constant 0 : i32
    return %arg0, %c0_i32 : i32, i32
  }
  func.func @transform_1(%arg0: i32) -> (i32, i32) {
    %c0_i32 = arith.constant 0 : i32
    %c0_i32_0 = arith.constant 0 : i32
    return %arg0, %c0_i32 : i32, i32
  }
}

</mosaic_0001>

<llo_original>
// kernel: tpu_custom_call.1
$region0: #{tpu_custom_call.1}
  #allocation0 [shape = 'u32[]', space=smem, size = 0x4, offset = 0x4, fixed_abs, tag = 'smem constant byte address 0x4 - core index']
  #allocation1 [shape = 'u32[144,128]{1,0:T(1,128)}', space=vmem, size = 0x12000, scoped, tag = 'internal scratch']
  %s0 = inlined_call_operand.hbm [shape: f32[8,256], index: 0, kind: input, shape index: {}]
  %s1 = inlined_call_operand.vmem [shape: f32[8,1], index: 1, kind: output, shape index: {}]
  %s2 = sld [smem:[#allocation0]]
  $region18: #{tpu_custom_call.1} parent=0
    _
  %s4 = ssub.s32 1, %s2
  %s5 = scalar_select 0, %s4, %s2
  $region1: #{tpu_custom_call.1} parent=0
    #allocation2 [shape = 'u8[8192]{0}', space=vmem, size = 0x2000, scoped, tag = 'input window, operand 0, single buffered']
    #allocation3 [shape = 's32[1]{0}', space=sflag, size = 0x4, scoped, tag = 'scoped memory for tpu_custom_call.1']
    %6 = vsyncpa [#allocation3], 0
    // Predicated region
    $region2: #{tpu_custom_call.1} parent=1 // pred_check
      _
    $region3: #{tpu_custom_call.1} parent=1 // pred_check_branch
      %8 = sbr.rel (0) target = $region5
    $region4: #{tpu_custom_call.1} parent=1 // pred_region
      %s10 = ssub.s32 256, 256
      %11 = vsyncadd [#allocation3], %s10
      %s13 = sshll.u32 [#allocation2], 4
      %s14 = int_to_ptr.vmem [resolvable:$true] %s13
      %16 = dma.hbm_to_vmem [thread:$0]  %s0, 256, %s14, [#allocation3]
    $region5: #{tpu_custom_call.1} parent=1 // pred_fallthru
      _
    // Predicated region
    $region6: #{tpu_custom_call.1} parent=1 // pred_check
      _
    $region7: #{tpu_custom_call.1} parent=1 // pred_check_branch
      %18 = sbr.rel (0) target = $region9
    $region8: #{tpu_custom_call.1} parent=1 // pred_region
      %19 = dma.done [#allocation3], 256
    $region9: #{tpu_custom_call.1} parent=1 // pred_fallthru
      _
    %v20 = vld [vmem:[#allocation2] sm:$0xff]
    %v21 = vld [vmem:[#allocation2 + $0x8] sm:$0xff]
    %23 = vset.pattern.permute.xlu0 0
    %24 = vperm.xlu0 %23, %v20
    %v25 = vpop.permute.xlu0 %24
    %v27 = vsub.f32 %v20, %v25
    %v28 = vsub.f32 %v21, %v25
    %v29 = vadd.f32 %v27, %v28
    %30 = vadd.xlane.f32.xlu0 %v29
    %v31 = vpop.xlane.xlu0 %30
    %v32 = vmul.f32 %v27, %v27
    %v33 = vmul.f32 %v28, %v28
    %v34 = vadd.f32 %v32, %v33
    %35 = vadd.xlane.f32.xlu0 %v34
    %v36 = vpop.xlane.xlu0 %35
    %v37 = vrcp.pop 256.0
    %v38 = vmul.f32 %v31, %v37
    %v39 = vmul.f32 %v38, 256.0
    %v40 = vmul.f32 %v39, %v38
    %v41 = vsub.f32 %v36, %v40
    %v42 = vrcp.pop 255.0
    %v43 = vmul.f32 %v41, %v42
    %v44 = vmax.f32 %v43, 0.0
    %v45 = vrsqrt.pop %v44
    %v46 = vmul.f32 %v44, %v45
    %vm47 = vcmp.eq.f32.partialorder %v44, inf
    %v48 = vsel %vm47, %v44, %v46
    %vm49 = vcmp.eq.f32.partialorder %v44, 0.0
    %v50 = vand.u32 %v44, 2147483648
    %v51 = vsel %vm49, %v50, %v48
    %vm52 = vcmask 7168
    %53 = vst.msk [vmem:[%s1] sm:$0xff] %vm52, %v51
    // Predicated region
    $region10: #{tpu_custom_call.1} parent=1 // pred_check
      _
    $region11: #{tpu_custom_call.1} parent=1 // pred_check_branch
      %55 = sbr.rel (0) target = $region13
    $region12: #{tpu_custom_call.1} parent=1 // pred_region
      _
    $region13: #{tpu_custom_call.1} parent=1 // pred_fallthru
      _
    // Predicated region
    $region14: #{tpu_custom_call.1} parent=1 // pred_check
      _
    $region15: #{tpu_custom_call.1} parent=1 // pred_check_branch
      %57 = sbr.rel (0) target = $region17
    $region16: #{tpu_custom_call.1} parent=1 // pred_region
      _
    $region17: #{tpu_custom_call.1} parent=1 // pred_fallthru
      _
    %58 = vsyncpa [#allocation3], 1

</llo_original>
